<compile_context>
chip_gen: v7x
topology: tpu7x:2x2x1
jax: 0.10.0
libtpu: 0.0.40
codegen_flags: <defaults>
</compile_context>

<pallas_src>
import functools

import jax
import jax.numpy as jnp
from jax.experimental import pallas as pl
from jax.experimental.pallas import tpu as pltpu

_LANE = 128  # vreg lane width (last dim)


def _round_up(n, m):
    return ((n + m - 1) // m) * m


def _sublane(dtype):
    # Packed-sublane count per dtype width (f32: 8, bf16: 16, int8/fp8: 32).
    return {4: 8, 2: 16, 1: 32}.get(jnp.dtype(dtype).itemsize, 8)


def _vmem_capacity_bytes():
    try:
        return int(pltpu.get_tpu_info().vmem_capacity_bytes)
    except Exception:
        return 64 << 20  # conservative (v7x per-core); v5e/v6e have 128 MiB


def residual_linear_kernel(x_ref, w_ref, b_ref, o_ref, *, tn):
    # x_ref: [tm, Hp]   row tile (resident across the N axis)
    # w_ref: [Hp, tn]   weight column tile (full weight when tn == Hp)
    # b_ref: [1,  tn]
    # o_ref: [tm, tn]
    x = x_ref[...]
    # MXU matmul in the operands' native dtype, f32 accumulation.
    y = jnp.dot(x, w_ref[...], preferred_element_type=jnp.float32)

    # Residual uses only the output-column slice of x for this N tile.
    if tn == x_ref.shape[1]:
        x_res = x
    else:
        col = pl.multiple_of(pl.program_id(1) * tn, tn)
        x_res = x_ref[:, pl.ds(col, tn)]

    # f32 epilogue (cheap, hidden under the MXU); single downcast at the store.
    y = y + b_ref[...].astype(jnp.float32) + x_res.astype(jnp.float32)
    o_ref[...] = y.astype(o_ref.dtype)


def residual_add_linear(x, w, b, *, tm=512):
    """out = fn(x) + x  with fn(x) = x @ w + b, fused in one Pallas kernel.

    x: [B, S, H], w: [H, H] (input-major: out = x @ w), b: [H].
    """
    B, S, H = x.shape
    M = B * S
    dt = x.dtype
    dt_size = jnp.dtype(dt).itemsize
    sub = _sublane(dt)

    # ---- hidden-dim padding policy -------------------------------------
    # Lane-dense pad only when it costs <=25% extra traffic; otherwise keep
    # full-H blocks (legal since block dim == array dim) and accept masked
    # stores — at small H the kernel is DMA-bound and padding would dominate.
    Hp_full = _round_up(H, _LANE)
    Hp = Hp_full if Hp_full <= H * 1.25 else H

    # ---- row tile: dtype-aware sublane multiple, >=2 grid steps along M ----
    if M <= sub:
        tm = M
    else:
        tm = _round_up(min(tm, M), sub)
        if pl.cdiv(M, tm) < 2:
            tm = _round_up(pl.cdiv(M, 2), sub)
    m_tiles = pl.cdiv(M, tm)

    # ---- weight residency / N tiling so everything fits VMEM --------------
    vmem_cap = _vmem_capacity_bytes()
    budget = int(vmem_cap * 0.75)           # headroom for Mosaic scratch/sems
    x_bytes = 2 * tm * Hp * dt_size         # double-buffered x tiles

    def _fits(tn, w_bufs):
        w_bytes = w_bufs * (Hp * tn + tn) * dt_size
        out_bytes = 2 * tm * tn * dt_size
        return x_bytes + w_bytes + out_bytes <= budget

    if _fits(Hp, 2):
        tn, w_bufs = Hp, 2          # fully resident, default double-buffering
    elif _fits(Hp, 1) or Hp % _LANE != 0:
        tn, w_bufs = Hp, 1          # resident, single buffer (never re-fetched)
    else:
        # Stream the weight in (Hp, tn) column tiles along a 2nd grid axis.
        # tn must divide Hp (Hp is a multiple of 128 here) so the in-kernel
        # residual slice of x never reads out of bounds.
        w_bufs = 2
        q = Hp // _LANE
        tn = _LANE
        for d in range(q, 0, -1):
            if q % d == 0 and _fits(d * _LANE, 2):
                tn = d * _LANE
                break
    n_tiles = pl.cdiv(Hp, tn)

    # ---- host-side prep (no M padding; H pad only when chosen above) ------
    x2 = x.reshape(M, H)
    if Hp != H:
        # Zero-pad the contraction dim (required for the un-tiled K reduction)
        # and the output columns (sliced off below).
        x2 = jnp.pad(x2, ((0, 0), (0, Hp - H)))
        wp = jnp.pad(w, ((0, Hp - H), (0, Hp - H)))
        bp = jnp.pad(b, (0, Hp - H)).reshape(1, Hp)
    else:
        wp = w
        bp = b.reshape(1, Hp)

    # ---- BlockSpecs --------------------------------------------------------
    x_spec = pl.BlockSpec((tm, Hp), lambda i, j: (i, 0))   # resident across j
    out_spec = pl.BlockSpec((tm, tn), lambda i, j: (i, j))
    if w_bufs == 1:
        # Constant block index -> never re-fetched; a 2nd buffer is dead VMEM.
        w_spec = pl.BlockSpec((Hp, tn), lambda i, j: (0, j),
                              pipeline_mode=pl.Buffered(1))
        b_spec = pl.BlockSpec((1, tn), lambda i, j: (0, j),
                              pipeline_mode=pl.Buffered(1))
    else:
        w_spec = pl.BlockSpec((Hp, tn), lambda i, j: (0, j))
        b_spec = pl.BlockSpec((1, tn), lambda i, j: (0, j))

    # ---- VMEM limit and cost estimate --------------------------------------
    needed = (x_bytes
              + w_bufs * (Hp * tn + tn) * dt_size
              + 2 * tm * tn * dt_size)
    vmem_limit = int(min(vmem_cap, max(needed * 1.25 + (2 << 20), 32 << 20)))

    w_passes = 1 if tn == Hp else m_tiles   # weight re-streamed per row tile
    cost = pl.CostEstimate(
        flops=2 * M * Hp * Hp + 2 * M * Hp,
        transcendentals=0,
        bytes_accessed=(2 * M * Hp + w_passes * Hp * Hp + Hp) * dt_size,
    )

    out2 = pl.pallas_call(
        functools.partial(residual_linear_kernel, tn=tn),
        out_shape=jax.ShapeDtypeStruct((M, Hp), dt),
        grid_spec=pltpu.PrefetchScalarGridSpec(
            num_scalar_prefetch=0,
            grid=(m_tiles, n_tiles),
            in_specs=[x_spec, w_spec, b_spec],
            out_specs=out_spec,
        ),
        compiler_params=pltpu.CompilerParams(
            # Row tiles are independent -> shard M across TensorCores (v7x);
            # the output-column axis is a plain sequential loop.
            dimension_semantics=("parallel", "arbitrary"),
            vmem_limit_bytes=vmem_limit,
        ),
        cost_estimate=cost,
    )(x2, wp, bp)

    out2 = out2 if Hp == H else out2[:, :H]
    return out2.reshape(B, S, H)


if __name__ == "__main__":
    B, S, H = 2, 8, 32

    key = jax.random.PRNGKey(0)
    kx, kw, kb = jax.random.split(key, 3)

    x = jax.random.normal(kx, (B, S, H), dtype=jnp.float32)
    # Deterministic Linear(H, H) parameters (fan-in uniform init like PyTorch).
    bound = 1.0 / (H ** 0.5)
    w = jax.random.uniform(kw, (H, H), minval=-bound, maxval=bound,
                           dtype=jnp.float32)
    b = jax.random.uniform(kb, (H,), minval=-bound, maxval=bound,
                           dtype=jnp.float32)

    out = residual_add_linear(x, w, b)
    out = jax.block_until_ready(out)

    # Reference: ResidualAdd semantics = fn(x) + x.
    ref = jnp.einsum("bsh,hk->bsk", x, w) + b + x
    assert jnp.allclose(out, ref, atol=1e-5, rtol=1e-5), "mismatch vs reference"

    print("KERNEL_OK")
</pallas_src>

<mosaic_0001>
module attributes {stable_mosaic.version = 11 : i64} {
  func.func @residual_linear_kernel(%arg0: i32, %arg1: i32, %arg2: memref<8x32xf32, #tpu.memory_space<vmem>>, %arg3: memref<32x32xf32, #tpu.memory_space<vmem>>, %arg4: memref<1x32xf32, #tpu.memory_space<vmem>>, %arg5: memref<8x32xf32, #tpu.memory_space<vmem>>) attributes {dimension_semantics = [#tpu.dimension_semantics<parallel>, #tpu.dimension_semantics<arbitrary>], iteration_bounds = array<i64: 2, 1>, scalar_prefetch = 0 : i64, scratch_operands = 0 : i64, tpu.core_type = #tpu.core_type<tc>, window_params = [{transform_indices = @transform_0, window_bounds = array<i64: 8, 32>}, {transform_indices = @transform_1, window_bounds = array<i64: 32, 32>}, {transform_indices = @transform_2, window_bounds = array<i64: 1, 32>}, {transform_indices = @transform_3, window_bounds = array<i64: 8, 32>}]} {
    %c0 = arith.constant 0 : index
    %c0_0 = arith.constant 0 : index
    %0 = vector.load %arg2[%c0, %c0_0] : memref<8x32xf32, #tpu.memory_space<vmem>>, vector<8x32xf32>
    %c0_1 = arith.constant 0 : index
    %c0_2 = arith.constant 0 : index
    %1 = vector.load %arg3[%c0_1, %c0_2] : memref<32x32xf32, #tpu.memory_space<vmem>>, vector<32x32xf32>
    %cst = arith.constant dense<0.000000e+00> : vector<8x32xf32>
    %2 = tpu.matmul %0, %1, %cst {dimension_numbers = #tpu.dot_dimension_numbers<[1], [0], [0], [1], [0, 0, 1, 1], [], []>} : vector<8x32xf32>, vector<32x32xf32>, vector<8x32xf32> -> vector<8x32xf32>
    %c0_3 = arith.constant 0 : index
    %c0_4 = arith.constant 0 : index
    %3 = vector.load %arg4[%c0_3, %c0_4] : memref<1x32xf32, #tpu.memory_space<vmem>>, vector<1x32xf32>
    %4 = vector.broadcast %3 : vector<1x32xf32> to vector<8x32xf32>
    %5 = arith.addf %2, %4 : vector<8x32xf32>
    %6 = arith.addf %5, %0 : vector<8x32xf32>
    %c0_5 = arith.constant 0 : index
    %c0_6 = arith.constant 0 : index
    %7 = vector.load %arg5[%c0_5, %c0_6] : memref<8x32xf32, #tpu.memory_space<vmem>>, vector<8x32xf32>
    tpu.vector_store %arg5[%c0_5, %c0_6], %6 {strides = array<i32>} : memref<8x32xf32, #tpu.memory_space<vmem>>, vector<8x32xf32>,
    return
  }
  func.func @transform_0(%arg0: i32, %arg1: i32) -> (i32, i32) {
    %c0_i32 = arith.constant 0 : i32
    %c0_i32_0 = arith.constant 0 : i32
    return %arg0, %c0_i32 : i32, i32
  }
  func.func @transform_1(%arg0: i32, %arg1: i32) -> (i32, i32) {
    %c0_i32 = arith.constant 0 : i32
    %c0_i32_0 = arith.constant 0 : i32
    return %c0_i32, %arg1 : i32, i32
  }
  func.func @transform_2(%arg0: i32, %arg1: i32) -> (i32, i32) {
    %c0_i32 = arith.constant 0 : i32
    %c0_i32_0 = arith.constant 0 : i32
    return %c0_i32, %arg1 : i32, i32
  }
  func.func @transform_3(%arg0: i32, %arg1: i32) -> (i32, i32) {
    %c0_i32 = arith.constant 0 : i32
    return %arg0, %arg1 : i32, i32
  }
}

</mosaic_0001>

<llo_original>
// kernel: tpu_custom_call.1
$region0: #{tpu_custom_call.1}
  #allocation0 [shape = 'u32[]', space=smem, size = 0x4, offset = 0x4, fixed_abs, tag = 'smem constant byte address 0x4 - core index']
  #allocation1 [shape = 'u32[144,128]{1,0:T(1,128)}', space=vmem, size = 0x12000, scoped, tag = 'internal scratch']
  %s0 = inlined_call_operand.hbm [shape: f32[16,32], index: 0, kind: input, shape index: {}]
  %s1 = inlined_call_operand.hbm [shape: f32[32,32], index: 1, kind: input, shape index: {}]
  %s2 = inlined_call_operand.vmem [shape: f32[1,32], index: 2, kind: input, shape index: {}]
  %s3 = inlined_call_operand.hbm [shape: f32[16,32], index: 3, kind: output, shape index: {}]
  %s4 = sld [smem:[#allocation0]]
  $region53: #{tpu_custom_call.1} parent=0
    _
  %s6 = ssub.s32 1, %s4
  %s7 = scalar_select 0, %s6, %s4
  $region1: #{tpu_custom_call.1} parent=0
    #allocation2 [shape = 'u8[8192]{0}', space=vmem, size = 0x2000, scoped, tag = 'input window, operand 0']
    #allocation3 [shape = 's32[2]{0}', space=sflag, size = 0x8, scoped, tag = 'scoped memory for tpu_custom_call.1']
    #allocation4 [shape = 's32[2]{0}', space=sflag, size = 0x8, scoped, tag = 'scoped memory for tpu_custom_call.1']
    #allocation5 [shape = 'u8[16384]{0}', space=vmem, size = 0x4000, scoped, tag = 'input window, operand 1, single buffered']
    #allocation6 [shape = 's32[1]{0}', space=sflag, size = 0x4, scoped, tag = 'scoped memory for tpu_custom_call.1']
    #allocation7 [shape = 'u8[8192]{0}', space=vmem, size = 0x2000, scoped, tag = 'output window, operand 0']
    %8 = vsyncpa [#allocation3], 0
    %s9 = scalar_lea.sflag [#allocation3], 1
    %10 = vsyncpa %s9, 0
    %11 = vsyncpa [#allocation6], 0
    %12 = vsyncpa [#allocation4], 0
    %s13 = scalar_lea.sflag [#allocation4], 1
    %14 = vsyncpa %s13, 0
    loop: start=0, step=1, limit=4
    $region2: #{tpu_custom_call.1} parent=1 // loop_pre_header
      _
    $region3: #{tpu_custom_call.1} parent=1 // loop_header
      %s16 = sphi 0, %s20
      %p17 = scmp.ge.s32.totalorder %s16, 4
      %s23 = sphi 0, %s35
      %s24 = sphi 0, %s31
      %s25 = sphi 0, %s23
      %s26 = sphi 0, %s24
      %s27 = sphi 0, %s25
      %s28 = sphi 0, %s26
      %s38 = sphi 0, %s40
      %s41 = sphi 0, %s38
      %s42 = sphi 0, %s41
      %s58 = sphi 0, %s42
      %s64 = sphi 0, %s66
      %s67 = sphi 0, %s64
      %s68 = sphi 0, %s67
      %s84 = sphi 0, %s68
      %s90 = sphi 0, %s92
      %s93 = sphi 0, %s90
      %s94 = sphi 0, %s93
      %s110 = sphi 0, %s94
      %s118 = sphi 0, %s120
      %s121 = sphi 0, %s118
      %s122 = sphi 0, %s121
      %s138 = sphi 0, %s122
    $region4: #{tpu_custom_call.1} parent=1 // loop_header_branch
      %19 = sbr.rel (%p17) target = $region8
    $region5: #{tpu_custom_call.1} parent=1 // loop_body
      %s21 = ssub.s32 %s16, 1
      %s22 = ssub.s32 %s16, 2
      %s29 = sadd.s32 1, %s24
      %p30 = scmp.ge.s32.totalorder %s29, 1
      %s31 = scalar_select %p30, 0, %s29
      %s32 = sadd.s32 1, %s23
      %s33 = scalar_select %p30, %s32, %s23
      %p34 = scmp.ge.s32.totalorder %s33, 2
      %s35 = scalar_select %p34, 0, %s33
      %s36 = ssub.s32 %s23, %s35
      %p37 = scmp.eq.s32.totalorder %s36, 0
      %s39 = sadd.s32 %s38, 1
      %s40 = scalar_select %p37, %s38, %s39
      %p43 = pneg %p37
      %p44 = scmp.eq.s32.totalorder %s16, 1
      %p45 = por %p43, %p44
      %p46 = scmp.ne.s32.totalorder %s38, %s41
      %p47 = scmp.eq.s32.totalorder %s16, 0
      %p48 = por %p46, %p47
      %p49 = scmp.ne.s32.totalorder %s38, %s41
      %p50 = scmp.eq.s32.totalorder %s21, 1
      %p51 = por %p49, %p50
      %p52 = scmp.ne.s32.totalorder %s41, %s42
      %p53 = scmp.eq.s32.totalorder %s21, 0
      %p54 = por %p52, %p53
      %p55 = scmp.ne.s32.totalorder %s41, %s42
      %p56 = scmp.eq.s32.totalorder %s22, 1
      %p57 = por %p55, %p56
      %p59 = scmp.ne.s32.totalorder %s42, %s58
      %p60 = scmp.eq.s32.totalorder %s22, 0
      %p61 = por %p59, %p60
      %s62 = ssub.s32 %s24, %s31
      %p63 = scmp.eq.s32.totalorder %s62, 0
      %s65 = sadd.s32 %s64, 1
      %s66 = scalar_select %p63, %s64, %s65
      %p69 = pneg %p63
      %p70 = scmp.eq.s32.totalorder %s16, 1
      %p71 = por %p69, %p70
      %p72 = scmp.ne.s32.totalorder %s64, %s67
      %p73 = scmp.eq.s32.totalorder %s16, 0
      %p74 = por %p72, %p73
      %p75 = scmp.ne.s32.totalorder %s64, %s67
      %p76 = scmp.eq.s32.totalorder %s21, 1
      %p77 = por %p75, %p76
      %p78 = scmp.ne.s32.totalorder %s67, %s68
      %p79 = scmp.eq.s32.totalorder %s21, 0
      %p80 = por %p78, %p79
      %p81 = scmp.ne.s32.totalorder %s67, %s68
      %p82 = scmp.eq.s32.totalorder %s22, 1
      %p83 = por %p81, %p82
      %p85 = scmp.ne.s32.totalorder %s68, %s84
      %p86 = scmp.eq.s32.totalorder %s22, 0
      %p87 = por %p85, %p86
      %s88 = ssub.s32 %s24, %s31
      %p89 = scmp.eq.s32.totalorder %s88, 0
      %s91 = sadd.s32 %s90, 1
      %s92 = scalar_select %p89, %s90, %s91
      %p95 = pneg %p89
      %p96 = scmp.eq.s32.totalorder %s16, 1
      %p97 = por %p95, %p96
      %p98 = scmp.ne.s32.totalorder %s90, %s93
      %p99 = scmp.eq.s32.totalorder %s16, 0
      %p100 = por %p98, %p99
      %p101 = scmp.ne.s32.totalorder %s90, %s93
      %p102 = scmp.eq.s32.totalorder %s21, 1
      %p103 = por %p101, %p102
      %p104 = scmp.ne.s32.totalorder %s93, %s94
      %p105 = scmp.eq.s32.totalorder %s21, 0
      %p106 = por %p104, %p105
      %p107 = scmp.ne.s32.totalorder %s93, %s94
      %p108 = scmp.eq.s32.totalorder %s22, 1
      %p109 = por %p107, %p108
      %p111 = scmp.ne.s32.totalorder %s94, %s110
      %p112 = scmp.eq.s32.totalorder %s22, 0
      %p113 = por %p111, %p112
      %s114 = ssub.s32 %s23, %s35
      %s115 = ssub.s32 %s24, %s31
      %s116 = sor.u32 %s114, %s115
      %p117 = scmp.eq.s32.totalorder %s116, 0
      %s119 = sadd.s32 %s118, 1
      %s120 = scalar_select %p117, %s118, %s119
      %p123 = pneg %p117
      %p124 = scmp.eq.s32.totalorder %s16, 1
      %p125 = por %p123, %p124
      %p126 = scmp.ne.s32.totalorder %s118, %s121
      %p127 = scmp.eq.s32.totalorder %s16, 0
      %p128 = por %p126, %p127
      %p129 = scmp.ne.s32.totalorder %s118, %s121
      %p130 = scmp.eq.s32.totalorder %s21, 1
      %p131 = por %p129, %p130
      %p132 = scmp.ne.s32.totalorder %s121, %s122
      %p133 = scmp.eq.s32.totalorder %s21, 0
      %p134 = por %p132, %p133
      %p135 = scmp.ne.s32.totalorder %s121, %s122
      %p136 = scmp.eq.s32.totalorder %s22, 1
      %p137 = por %p135, %p136
      %p139 = scmp.ne.s32.totalorder %s122, %s138
      %p140 = scmp.eq.s32.totalorder %s22, 0
      %p141 = por %p139, %p140
      %p142 = scmp.le.s32.totalorder 1, %s16
      %p143 = scmp.lt.s32.totalorder %s16, 3
      %p144 = pnand %p142, %p143
      %p145 = pneg %p144
      // Predicated region
      $region9: #{tpu_custom_call.1} parent=5 // pred_check
        _
      $region10: #{tpu_custom_call.1} parent=5 // pred_check_branch
        %147 = sbr.rel (%p144) target = $region12
      $region11: #{tpu_custom_call.1} parent=5 // pred_region
        %s148 = ssub.s32 %s16, 1
        // Predicated region
        $region13: #{tpu_custom_call.1} parent=11 // pred_check
          %p149 = pneg %p80
        $region14: #{tpu_custom_call.1} parent=11 // pred_check_branch
          %151 = sbr.rel (%p149) target = $region16
        $region15: #{tpu_custom_call.1} parent=11 // pred_region
          %s153 = ssub.s32 512, 512
          %154 = vsyncadd [#allocation6], %s153
          %s155 = smul.addr %s26, 128
          %s156 = scalar_lea.hbm %s1, %s155
          %s157 = sshll.u32 [#allocation5], 4
          %s158 = int_to_ptr.vmem [resolvable:$true] %s157
          %163 = dma.hbm_to_vmem [thread:$0]  %s156, 512, %s158, [#allocation6], 128, 128, 8
        $region16: #{tpu_custom_call.1} parent=11 // pred_fallthru
          _
        // Predicated region
        $region17: #{tpu_custom_call.1} parent=11 // pred_check
          %p164 = pneg %p106
        $region18: #{tpu_custom_call.1} parent=11 // pred_check_branch
          %166 = sbr.rel (%p164) target = $region20
        $region19: #{tpu_custom_call.1} parent=11 // pred_region
          %p167 = scmp.lt.s32.totalorder %s26, 0
          %s168 = scalar_select %p167, %s26, 0
          %s169 = scalar_lea.vmem %s2, %s168
        $region20: #{tpu_custom_call.1} parent=11 // pred_fallthru
          _
      $region12: #{tpu_custom_call.1} parent=5 // pred_fallthru
        _
      %p170 = scmp.lt.s32.totalorder %s16, 2
      // Predicated region
      $region21: #{tpu_custom_call.1} parent=5 // pred_check
        %p171 = pneg %p170
      $region22: #{tpu_custom_call.1} parent=5 // pred_check_branch
        %173 = sbr.rel (%p171) target = $region24
      $region23: #{tpu_custom_call.1} parent=5 // pred_region
        // Predicated region
        $region25: #{tpu_custom_call.1} parent=23 // pred_check
          %p174 = pneg %p48
        $region26: #{tpu_custom_call.1} parent=23 // pred_check_branch
          %176 = sbr.rel (%p174) target = $region28
        $region27: #{tpu_custom_call.1} parent=23 // pred_region
          %s177 = sand.u32 %s38, 1
          %s178 = scalar_lea.sflag [#allocation3], %s177
          %s179 = sand.u32 %s38, 1
          %s180 = smul.addr %s179, 8
          %s181 = scalar_lea.vmem [#allocation2], %s180
          %s183 = ssub.s32 128, 128
          %184 = vsyncadd %s178, %s183
          %s185 = smul.addr %s23, 128
          %s186 = scalar_lea.hbm %s0, %s185
          %s188 = sshll.u32 %s181, 4
          %s189 = int_to_ptr.vmem [resolvable:$true] %s188
          %191 = dma.hbm_to_vmem [thread:$0]  %s186, 128, %s189, %s178
        $region28: #{tpu_custom_call.1} parent=23 // pred_fallthru
          _
      $region24: #{tpu_custom_call.1} parent=5 // pred_fallthru
        _
      %p192 = scmp.le.s32.totalorder 1, %s16
      %p193 = scmp.lt.s32.totalorder %s16, 3
      %p194 = pnand %p192, %p193
      %p195 = pneg %p194
      // Predicated region
      $region29: #{tpu_custom_call.1} parent=5 // pred_check
        _
      $region30: #{tpu_custom_call.1} parent=5 // pred_check_branch
        %197 = sbr.rel (%p194) target = $region32
      $region31: #{tpu_custom_call.1} parent=5 // pred_region
        %s198 = ssub.s32 %s16, 1
        %s199 = sand.u32 %s41, 1
        %s200 = scalar_lea.sflag [#allocation3], %s199
        %s201 = sand.u32 %s41, 1
        %s202 = smul.addr %s201, 8
        %s203 = scalar_lea.vmem [#allocation2], %s202
        // Predicated region
        $region33: #{tpu_custom_call.1} parent=31 // pred_check
          %p204 = pneg %p54
        $region34: #{tpu_custom_call.1} parent=31 // pred_check_branch
          %206 = sbr.rel (%p204) target = $region36
        $region35: #{tpu_custom_call.1} parent=31 // pred_region
          %207 = dma.done %s200, 128
        $region36: #{tpu_custom_call.1} parent=31 // pred_fallthru
          _
        // Predicated region
        $region37: #{tpu_custom_call.1} parent=31 // pred_check
          %p208 = pneg %p80
        $region38: #{tpu_custom_call.1} parent=31 // pred_check_branch
          %210 = sbr.rel (%p208) target = $region40
        $region39: #{tpu_custom_call.1} parent=31 // pred_region
          %211 = dma.done [#allocation6], 512
        $region40: #{tpu_custom_call.1} parent=31 // pred_fallthru
          _
        %s212 = sand.u32 %s41, 1
        %s213 = scalar_lea.sflag [#allocation3], %s212
        %s214 = sand.u32 %s41, 1
        %s215 = smul.addr %s214, 8
        %s216 = scalar_lea.vmem [#allocation2], %s215
        %p217 = pneg %p54
        %p218 = pneg %p51
        %p219 = pneg %p80
        %p220 = pneg %p77
        %p221 = scmp.lt.s32.totalorder %s26, 0
        %s222 = scalar_select %p221, %s26, 0
        %s223 = scalar_lea.vmem %s2, %s222
        %p224 = pneg %p106
        %p225 = pneg %p103
        %p226 = pneg %p134
        %p227 = pneg %p131
        %s228 = sand.u32 %s121, 1
        %s229 = scalar_lea.sflag [#allocation4], %s228
        %s230 = sand.u32 %s121, 1
        %s231 = smul.addr %s230, 8
        %s232 = scalar_lea.vmem [#allocation7], %s231
        %p233 = scmp.lt.s32.totalorder %s26, 0
        %s234 = scalar_select %p233, %s26, 0
        %s235 = scalar_lea.vmem %s2, %s234
        %v236 = vld [vmem:[%s203] sm:$0xff]
        %v237 = vld [vmem:[#allocation5] sm:$0xff]
        %v238 = vld [vmem:[#allocation5 + $0x8] sm:$0xff]
        %v239 = vld [vmem:[#allocation5 + $0x10] sm:$0xff]
        %v240 = vld [vmem:[#allocation5 + $0x18] sm:$0xff]
        %v241 = vld [vmem:[%s235] sm:$0x1]
        %v243 = vlaneseq
        %v244 = vshrl.u32 %v243, 7
        %v245 = vsub.s32 0, %v244
        %v246 = vrot.slane %v241, %v245
        %vm248 = vcmask 261120
        %v250 = vsel %vm248, %v236, 0
        %252 = vmatprep.subr.mxu0 0.0
        %253 = vmatpush1.msra.mxu0 %v237
        %254 = vmatprep.subr.mxu0 0.0
        %255 = vmatpush1.msra.mxu0 %v238
        %256 = vmatprep.subr.mxu0 0.0
        %257 = vmatpush1.msra.mxu0 %v239
        %258 = vmatprep.subr.mxu0 0.0
        %259 = vmatpush1.msra.mxu0 %v240
        %260 = vmatprep.subr.mxu0 0.0
        %261 = vmatpush1.msra.mxu0 0.0
        %262 = vmatprep.subr.mxu0 0.0
        %263 = vmatpush1.msra.mxu0 0.0
        %264 = vmatprep.subr.mxu0 0.0
        %265 = vmatpush1.msra.mxu0 0.0
        %266 = vmatprep.subr.mxu0 0.0
        %267 = vmatpush1.msra.mxu0 0.0
        %268 = vmatprep.subr.mxu0 0.0
        %269 = vmatpush1.msra.mxu0 0.0
        %270 = vmatprep.subr.mxu0 0.0
        %271 = vmatpush1.msra.mxu0 0.0
        %272 = vmatprep.subr.mxu0 0.0
        %273 = vmatpush1.msra.mxu0 0.0
        %274 = vmatprep.subr.mxu0 0.0
        %275 = vmatpush1.msra.mxu0 0.0
        %276 = vmatprep.subr.mxu0 0.0
        %277 = vmatpush1.msra.mxu0 0.0
        %278 = vmatprep.subr.mxu0 0.0
        %279 = vmatpush1.msra.mxu0 0.0
        %280 = vmatprep.subr.mxu0 0.0
        %281 = vmatpush1.msra.mxu0 0.0
        %282 = vmatprep.subr.mxu0 0.0
        %283 = vmatpush1.msra.mxu0 0.0
        %284 = vmatprep.subr.mxu0 0.0
        %285 = vmatpush1.msra.mxu0 0.0
        %286 = vmatprep.subr.mxu0 0.0
        %287 = vmatpush1.msra.mxu0 0.0
        %288 = vmatprep.subr.mxu0 0.0
        %289 = vmatpush1.msra.mxu0 0.0
        %290 = vmatprep.subr.mxu0 0.0
        %291 = vmatpush1.msra.mxu0 0.0
        %292 = vmatprep.subr.mxu0 0.0
        %293 = vmatpush1.msra.mxu0 0.0
        %294 = vmatprep.subr.mxu0 0.0
        %295 = vmatpush1.msra.mxu0 0.0
        %296 = vmatprep.subr.mxu0 0.0
        %297 = vmatpush1.msra.mxu0 0.0
        %298 = vmatprep.subr.mxu0 0.0
        %299 = vmatpush1.msra.mxu0 0.0
        %300 = vmatprep.subr.mxu0 0.0
        %301 = vmatpush1.msra.mxu0 0.0
        %302 = vmatprep.subr.mxu0 0.0
        %303 = vmatpush1.msra.mxu0 0.0
        %304 = vmatprep.subr.mxu0 0.0
        %305 = vmatpush1.msra.mxu0 0.0
        %306 = vmatprep.subr.mxu0 0.0
        %307 = vmatpush1.msra.mxu0 0.0
        %308 = vmatprep.subr.mxu0 0.0
        %309 = vmatpush1.msra.mxu0 0.0
        %310 = vmatprep.subr.mxu0 0.0
        %311 = vmatpush1.msra.mxu0 0.0
        %312 = vmatprep.subr.mxu0 0.0
        %313 = vmatpush1.msra.mxu0 0.0
        %314 = vmatprep.subr.mxu0 0.0
        %315 = vmatpush1.msra.mxu0 0.0
        %316 = vmatprep.mubr.f32.mxu0 0.0
        %317 = vmatmul.mubr.f32.gmra.mrb[0].mxu0 %v250
        %v318 = vpop.f32.mrb[0].mxu0
        %v319 = vadd.f32 %v246, %v318
        %v320 = vpop.f32.mrb[0].mxu0
        %321 = vdwg.mxu0
        %v322 = vadd.f32 %v319, %v236
        %323 = vst.msk [vmem:[%s232] sm:$0xff] %vm248, %v322
        %s324 = sand.u32 %s121, 1
        %s325 = scalar_lea.sflag [#allocation4], %s324
        %s326 = sand.u32 %s121, 1
        %s327 = smul.addr %s326, 8
        %s328 = scalar_lea.vmem [#allocation7], %s327
        // Predicated region
        $region41: #{tpu_custom_call.1} parent=31 // pred_check
          %p329 = pneg %p131
        $region42: #{tpu_custom_call.1} parent=31 // pred_check_branch
          %331 = sbr.rel (%p329) target = $region44
        $region43: #{tpu_custom_call.1} parent=31 // pred_region
          %s333 = ssub.s32 128, 128
          %334 = vsyncadd %s325, %s333
          %s335 = sadd.s32 %s26, %s25
          %s336 = smul.addr %s335, 128
          %s337 = scalar_lea.hbm %s3, %s336
          %s339 = sshll.u32 %s328, 4
          %s340 = int_to_ptr.vmem [resolvable:$true] %s339
          %342 = dma.vmem_to_hbm [thread:$0]  %s340, 128, %s337, %s325
        $region44: #{tpu_custom_call.1} parent=31 // pred_fallthru
          _
      $region32: #{tpu_custom_call.1} parent=5 // pred_fallthru
        _
      %p343 = scmp.le.s32.totalorder 2, %s16
      // Predicated region
      $region45: #{tpu_custom_call.1} parent=5 // pred_check
        %p344 = pneg %p343
      $region46: #{tpu_custom_call.1} parent=5 // pred_check_branch
        %346 = sbr.rel (%p344) target = $region48
      $region47: #{tpu_custom_call.1} parent=5 // pred_region
        %s347 = ssub.s32 %s16, 2
        // Predicated region
        $region49: #{tpu_custom_call.1} parent=47 // pred_check
          %p348 = pneg %p137
        $region50: #{tpu_custom_call.1} parent=47 // pred_check_branch
          %350 = sbr.rel (%p348) target = $region52
        $region51: #{tpu_custom_call.1} parent=47 // pred_region
          %s351 = sand.u32 %s122, 1
          %s352 = scalar_lea.sflag [#allocation4], %s351
          %s353 = sand.u32 %s122, 1
          %s354 = smul.addr %s353, 8
          %s355 = scalar_lea.vmem [#allocation7], %s354
          %356 = dma.done %s352, 128
        $region52: #{tpu_custom_call.1} parent=47 // pred_fallthru
          _
      $region48: #{tpu_custom_call.1} parent=5 // pred_fallthru
        _
    $region6: #{tpu_custom_call.1} parent=1 // loop_footer
      %s20 = sadd.s32 1, %s16
    $region7: #{tpu_custom_call.1} parent=1 // loop_footer_branch
      %15 = sbr.rel target = $region3
    $region8: #{tpu_custom_call.1} parent=1 // loop_exit
      _
    %357 = vsyncpa [#allocation3], 1
    %s358 = scalar_lea.sflag [#allocation3], 1
    %359 = vsyncpa %s358, 1
    %360 = vsyncpa [#allocation6], 1
    %361 = vsyncpa [#allocation4], 1
    %s362 = scalar_lea.sflag [#allocation4], 1
    %363 = vsyncpa %s362, 1

</llo_original>
